<compile_context>
chip_gen: v7x
topology: tpu7x:2x2x1
jax: 0.10.0
libtpu: 0.0.40
codegen_flags: <defaults>
</compile_context>

<pallas_src>
import numpy as np
import jax
import jax.numpy as jnp
from jax.experimental import pallas as pl
from jax.experimental.pallas import tpu as pltpu

# ---- module constants (from ETC_event.__init__) -----------------------------
SIGMA = 10.0
RHO = 28.0
BETA = 8.0 / 3.0
EPI = 0.5          # self.epi
P_GAIN = 20.0      # self.p
STRENGTH = 0.5     # unused in forward

INV_2EPI = 1.0 / (2.0 * EPI)     # 1.0
INV_2P = 1.0 / (2.0 * P_GAIN)    # 0.025

# Deterministic "parameters" of the module (zero-initialised or unused by
# forward()) -- kept for fidelity with the nn.Module definition.
T0 = jnp.zeros((1,), jnp.float32)          # self.t0
INIT_X_ERR = jnp.zeros((1,), jnp.float32)  # self.init_x_err
INIT_Y_ERR = jnp.zeros((1,), jnp.float32)  # self.init_y_err
INIT_Z_ERR = jnp.zeros((1,), jnp.float32)  # self.init_z_err
K_GAIN = jnp.eye(3, dtype=jnp.float32)     # self.K (only used by lqr_qp)

LANE = 128          # lanes per batch-row
SUB_CHUNK = 8       # rows processed per inner compute step (one vreg / slab)


def etc_event_kernel(state_ref, out_ref):
    """One (6, TM, 128) block: axis 0 = component [x, y, z, e_x, e_y, e_z]."""
    tm = state_ref.shape[1]                      # static (multiple of 8, or full)
    step = SUB_CHUNK if tm % SUB_CHUNK == 0 else tm
    for i in range(tm // step):
        sl = slice(i * step, (i + 1) * step)     # static slice -> free
        x = state_ref[0, sl, :]
        y = state_ref[1, sl, :]
        z = state_ref[2, sl, :]
        e_x = state_ref[3, sl, :]
        e_y = state_ref[4, sl, :]
        e_z = state_ref[5, sl, :]

        # input = (x, y, z) + (e_x, e_y, e_z)
        xi = x + e_x
        yi = y + e_y
        zi = z + e_z

        # Lorenz drift at the perturbed point (used inside quad_qp's h).
        f1 = SIGMA * (yi - xi)
        f2 = RHO * xi - yi - xi * zi
        f3 = xi * yi - BETA * zi

        sq = xi * xi + yi * yi + zi * zi
        h = -(xi * f1 + yi * f2 + zi * f3) - sq * INV_2EPI

        # Closed-form solution of:
        #   min 0.5 u^T diag(2,2,2,2p) u   s.t.  xi*u1 + yi*u2 + zi*u3 - d <= h
        # u = 0 if h >= 0, else u = (h / (G P^{-1} G^T)) * P^{-1} G^T.
        # TODO(synk): the reference calls cvxopt solvers.qp in float64; this is
        # the exact analytic optimum of the same QP, evaluated in float32.
        denom = 0.5 * sq + INV_2P                # >= 0.025, no div-by-zero
        scale = jnp.where(h < 0.0, h / denom, jnp.zeros_like(h))
        half_scale = 0.5 * scale
        u1 = half_scale * xi
        u2 = half_scale * yi
        u3 = half_scale * zi
        # d = -scale * INV_2P  -- returned by quad_qp but unused in forward()

        dx = SIGMA * (y - x) + u1
        dy = RHO * x - y - x * z + u2
        dz = x * y - BETA * z + u3

        out_ref[0, sl, :] = dx
        out_ref[1, sl, :] = dy
        out_ref[2, sl, :] = dz
        out_ref[3, sl, :] = -dx
        out_ref[4, sl, :] = -dy
        out_ref[5, sl, :] = -dz


def etc_event_forward_ref(state):
    """Pure-JAX reference of ETC_event.forward (batched over columns)."""
    x, y, z, e_x, e_y, e_z = [state[i] for i in range(6)]
    xi, yi, zi = x + e_x, y + e_y, z + e_z
    f1 = SIGMA * (yi - xi)
    f2 = RHO * xi - yi - xi * zi
    f3 = xi * yi - BETA * zi
    sq = xi * xi + yi * yi + zi * zi
    h = -xi * f1 - yi * f2 - zi * f3 - sq / (2.0 * EPI)
    denom = 0.5 * sq + 1.0 / (2.0 * P_GAIN)
    scale = jnp.where(h < 0.0, h / denom, 0.0)
    u1, u2, u3 = 0.5 * scale * xi, 0.5 * scale * yi, 0.5 * scale * zi
    dx = SIGMA * (y - x) + u1
    dy = RHO * x - y - x * z + u2
    dz = x * y - BETA * z + u3
    return jnp.stack([dx, dy, dz, -dx, -dy, -dz], axis=0)


def etc_event_forward(state, *, block_rows=256, min_pallas_batch=512):
    """state: (6, B) float32 rows = [x, y, z, e_x, e_y, e_z]. Returns (6, B)."""
    state = jnp.asarray(state, jnp.float32)
    assert state.shape[0] == 6
    B = state.shape[1]

    # Tiny batches: the fused XLA elementwise graph beats a custom-call launch.
    if B < min_pallas_batch:
        return etc_event_forward_ref(state)

    # Batch split into R rows of 128 lanes (component-dense 3-D layout).
    R = pl.cdiv(B, LANE)
    B_pad = R * LANE
    if B_pad != B:
        state3 = jnp.pad(state, ((0, 0), (0, B_pad - B))).reshape(6, R, LANE)
    else:
        state3 = state.reshape(6, R, LANE)       # free (row-major reshape)

    # Block rows: multiple of 8 (or the full R if smaller). ~0.8 MiB/block at
    # TM=256 -> double-buffered in+out well under every gen's scoped VMEM.
    block_rows = max(8, ((block_rows + 7) // 8) * 8)
    tm = R if R <= block_rows else block_rows
    grid = (pl.cdiv(R, tm),)

    out3 = pl.pallas_call(
        etc_event_kernel,
        out_shape=jax.ShapeDtypeStruct((6, R, LANE), jnp.float32),
        grid_spec=pltpu.PrefetchScalarGridSpec(
            num_scalar_prefetch=0,
            grid=grid,
            in_specs=[pl.BlockSpec((6, tm, LANE), lambda i: (0, i, 0))],
            out_specs=pl.BlockSpec((6, tm, LANE), lambda i: (0, i, 0)),
        ),
        compiler_params=pltpu.CompilerParams(dimension_semantics=("parallel",)),
    )(state3)

    out = out3.reshape(6, B_pad)
    if B_pad != B:
        out = out[:, :B]
    return out


if __name__ == "__main__":
    key = jax.random.PRNGKey(0)

    # (batch, forward kwargs) -- exercises: even multi-step grid, lane padding,
    # ragged last block, and the small-batch pure-JAX fallback gate.
    cases = [
        (4096, dict(block_rows=8)),     # R=32, TM=8  -> grid=4 (even)
        (1000, dict()),                 # lane pad 1000 -> 1024, grid=1
        (4992, dict(block_rows=16)),    # R=39, TM=16 -> grid=3 (ragged last block)
        (8, dict()),                    # below threshold -> pure-JAX fallback
    ]

    for idx, (B, kwargs) in enumerate(cases):
        k = jax.random.fold_in(key, idx)
        # data ~ Uniform(-10, 10), matching the reference script's data init.
        state = jax.random.uniform(
            k, (6, B), minval=-10.0, maxval=10.0, dtype=jnp.float32
        )
        out = jax.block_until_ready(etc_event_forward(state, **kwargs))
        ref = etc_event_forward_ref(state)
        np.testing.assert_allclose(
            np.asarray(out), np.asarray(ref), rtol=1e-4, atol=1e-3
        )

    print("KERNEL_OK")
</pallas_src>

<mosaic_0001>
module attributes {stable_mosaic.version = 11 : i64} {
  func.func @etc_event_kernel(%arg0: i32, %arg1: memref<6x8x128xf32, #tpu.memory_space<vmem>>, %arg2: memref<6x8x128xf32, #tpu.memory_space<vmem>>) attributes {dimension_semantics = [#tpu.dimension_semantics<parallel>], iteration_bounds = array<i64: 4>, scalar_prefetch = 0 : i64, scratch_operands = 0 : i64, tpu.core_type = #tpu.core_type<tc>, window_params = [{transform_indices = @transform_0, window_bounds = array<i64: 6, 8, 128>}, {transform_indices = @transform_1, window_bounds = array<i64: 6, 8, 128>}]} {
    %c0 = arith.constant 0 : index
    %c0_0 = arith.constant 0 : index
    %c0_1 = arith.constant 0 : index
    %0 = vector.load %arg1[%c0, %c0_0, %c0_1] : memref<6x8x128xf32, #tpu.memory_space<vmem>>, vector<1x8x128xf32>
    %1 = vector.shape_cast %0 : vector<1x8x128xf32> to vector<8x128xf32>
    %c1 = arith.constant 1 : index
    %c0_2 = arith.constant 0 : index
    %c0_3 = arith.constant 0 : index
    %2 = vector.load %arg1[%c1, %c0_2, %c0_3] : memref<6x8x128xf32, #tpu.memory_space<vmem>>, vector<1x8x128xf32>
    %3 = vector.shape_cast %2 : vector<1x8x128xf32> to vector<8x128xf32>
    %c2 = arith.constant 2 : index
    %c0_4 = arith.constant 0 : index
    %c0_5 = arith.constant 0 : index
    %4 = vector.load %arg1[%c2, %c0_4, %c0_5] : memref<6x8x128xf32, #tpu.memory_space<vmem>>, vector<1x8x128xf32>
    %5 = vector.shape_cast %4 : vector<1x8x128xf32> to vector<8x128xf32>
    %c3 = arith.constant 3 : index
    %c0_6 = arith.constant 0 : index
    %c0_7 = arith.constant 0 : index
    %6 = vector.load %arg1[%c3, %c0_6, %c0_7] : memref<6x8x128xf32, #tpu.memory_space<vmem>>, vector<1x8x128xf32>
    %7 = vector.shape_cast %6 : vector<1x8x128xf32> to vector<8x128xf32>
    %c4 = arith.constant 4 : index
    %c0_8 = arith.constant 0 : index
    %c0_9 = arith.constant 0 : index
    %8 = vector.load %arg1[%c4, %c0_8, %c0_9] : memref<6x8x128xf32, #tpu.memory_space<vmem>>, vector<1x8x128xf32>
    %9 = vector.shape_cast %8 : vector<1x8x128xf32> to vector<8x128xf32>
    %c5 = arith.constant 5 : index
    %c0_10 = arith.constant 0 : index
    %c0_11 = arith.constant 0 : index
    %10 = vector.load %arg1[%c5, %c0_10, %c0_11] : memref<6x8x128xf32, #tpu.memory_space<vmem>>, vector<1x8x128xf32>
    %11 = vector.shape_cast %10 : vector<1x8x128xf32> to vector<8x128xf32>
    %12 = arith.addf %1, %7 : vector<8x128xf32>
    %13 = arith.addf %3, %9 : vector<8x128xf32>
    %14 = arith.addf %5, %11 : vector<8x128xf32>
    %15 = arith.subf %13, %12 : vector<8x128xf32>
    %cst = arith.constant 1.000000e+01 : f32
    %16 = vector.broadcast %cst : f32 to vector<8x128xf32>
    %17 = arith.mulf %16, %15 : vector<8x128xf32>
    %cst_12 = arith.constant 2.800000e+01 : f32
    %18 = vector.broadcast %cst_12 : f32 to vector<8x128xf32>
    %19 = arith.mulf %18, %12 : vector<8x128xf32>
    %20 = arith.subf %19, %13 : vector<8x128xf32>
    %21 = arith.mulf %12, %14 : vector<8x128xf32>
    %22 = arith.subf %20, %21 : vector<8x128xf32>
    %23 = arith.mulf %12, %13 : vector<8x128xf32>
    %cst_13 = arith.constant 2.66666675 : f32
    %24 = vector.broadcast %cst_13 : f32 to vector<8x128xf32>
    %25 = arith.mulf %24, %14 : vector<8x128xf32>
    %26 = arith.subf %23, %25 : vector<8x128xf32>
    %27 = arith.mulf %12, %12 : vector<8x128xf32>
    %28 = arith.mulf %13, %13 : vector<8x128xf32>
    %29 = arith.addf %27, %28 : vector<8x128xf32>
    %30 = arith.mulf %14, %14 : vector<8x128xf32>
    %31 = arith.addf %29, %30 : vector<8x128xf32>
    %32 = arith.mulf %12, %17 : vector<8x128xf32>
    %33 = arith.mulf %13, %22 : vector<8x128xf32>
    %34 = arith.addf %32, %33 : vector<8x128xf32>
    %35 = arith.mulf %14, %26 : vector<8x128xf32>
    %36 = arith.addf %34, %35 : vector<8x128xf32>
    %cst_14 = arith.constant 0.000000e+00 : f32
    %37 = vector.broadcast %cst_14 : f32 to vector<8x128xf32>
    %38 = arith.subf %37, %36 : vector<8x128xf32>
    %cst_15 = arith.constant 1.000000e+00 : f32
    %39 = vector.broadcast %cst_15 : f32 to vector<8x128xf32>
    %40 = arith.mulf %31, %39 : vector<8x128xf32>
    %41 = arith.subf %38, %40 : vector<8x128xf32>
    %cst_16 = arith.constant 5.000000e-01 : f32
    %42 = vector.broadcast %cst_16 : f32 to vector<8x128xf32>
    %43 = arith.mulf %42, %31 : vector<8x128xf32>
    %cst_17 = arith.constant 2.500000e-02 : f32
    %44 = vector.broadcast %cst_17 : f32 to vector<8x128xf32>
    %45 = arith.addf %43, %44 : vector<8x128xf32>
    %cst_18 = arith.constant 0.000000e+00 : f32
    %46 = vector.broadcast %cst_18 : f32 to vector<8x128xf32>
    %47 = arith.cmpf olt, %41, %46 : vector<8x128xf32>
    %48 = arith.divf %41, %45 : vector<8x128xf32>
    %cst_19 = arith.constant 0.000000e+00 : f32
    %49 = vector.broadcast %cst_19 : f32 to vector<8x128xf32>
    %50 = arith.select %47, %48, %49 : vector<8x128xi1>, vector<8x128xf32>
    %cst_20 = arith.constant 5.000000e-01 : f32
    %51 = vector.broadcast %cst_20 : f32 to vector<8x128xf32>
    %52 = arith.mulf %51, %50 : vector<8x128xf32>
    %53 = arith.mulf %52, %12 : vector<8x128xf32>
    %54 = arith.mulf %52, %13 : vector<8x128xf32>
    %55 = arith.mulf %52, %14 : vector<8x128xf32>
    %56 = arith.subf %3, %1 : vector<8x128xf32>
    %cst_21 = arith.constant 1.000000e+01 : f32
    %57 = vector.broadcast %cst_21 : f32 to vector<8x128xf32>
    %58 = arith.mulf %57, %56 : vector<8x128xf32>
    %59 = arith.addf %58, %53 : vector<8x128xf32>
    %cst_22 = arith.constant 2.800000e+01 : f32
    %60 = vector.broadcast %cst_22 : f32 to vector<8x128xf32>
    %61 = arith.mulf %60, %1 : vector<8x128xf32>
    %62 = arith.subf %61, %3 : vector<8x128xf32>
    %63 = arith.mulf %1, %5 : vector<8x128xf32>
    %64 = arith.subf %62, %63 : vector<8x128xf32>
    %65 = arith.addf %64, %54 : vector<8x128xf32>
    %66 = arith.mulf %1, %3 : vector<8x128xf32>
    %cst_23 = arith.constant 2.66666675 : f32
    %67 = vector.broadcast %cst_23 : f32 to vector<8x128xf32>
    %68 = arith.mulf %67, %5 : vector<8x128xf32>
    %69 = arith.subf %66, %68 : vector<8x128xf32>
    %70 = arith.addf %69, %55 : vector<8x128xf32>
    %c0_24 = arith.constant 0 : index
    %c0_25 = arith.constant 0 : index
    %c0_26 = arith.constant 0 : index
    %71 = vector.load %arg2[%c0_24, %c0_25, %c0_26] : memref<6x8x128xf32, #tpu.memory_space<vmem>>, vector<1x8x128xf32>
    %72 = vector.shape_cast %71 : vector<1x8x128xf32> to vector<8x128xf32>
    %73 = vector.shape_cast %59 : vector<8x128xf32> to vector<1x8x128xf32>
    tpu.vector_store %arg2[%c0_24, %c0_25, %c0_26], %73 {strides = array<i32>} : memref<6x8x128xf32, #tpu.memory_space<vmem>>, vector<1x8x128xf32>,
    %c1_27 = arith.constant 1 : index
    %c0_28 = arith.constant 0 : index
    %c0_29 = arith.constant 0 : index
    %74 = vector.load %arg2[%c1_27, %c0_28, %c0_29] : memref<6x8x128xf32, #tpu.memory_space<vmem>>, vector<1x8x128xf32>
    %75 = vector.shape_cast %74 : vector<1x8x128xf32> to vector<8x128xf32>
    %76 = vector.shape_cast %65 : vector<8x128xf32> to vector<1x8x128xf32>
    tpu.vector_store %arg2[%c1_27, %c0_28, %c0_29], %76 {strides = array<i32>} : memref<6x8x128xf32, #tpu.memory_space<vmem>>, vector<1x8x128xf32>,
    %c2_30 = arith.constant 2 : index
    %c0_31 = arith.constant 0 : index
    %c0_32 = arith.constant 0 : index
    %77 = vector.load %arg2[%c2_30, %c0_31, %c0_32] : memref<6x8x128xf32, #tpu.memory_space<vmem>>, vector<1x8x128xf32>
    %78 = vector.shape_cast %77 : vector<1x8x128xf32> to vector<8x128xf32>
    %79 = vector.shape_cast %70 : vector<8x128xf32> to vector<1x8x128xf32>
    tpu.vector_store %arg2[%c2_30, %c0_31, %c0_32], %79 {strides = array<i32>} : memref<6x8x128xf32, #tpu.memory_space<vmem>>, vector<1x8x128xf32>,
    %cst_33 = arith.constant 0.000000e+00 : f32
    %80 = vector.broadcast %cst_33 : f32 to vector<8x128xf32>
    %81 = arith.subf %80, %59 : vector<8x128xf32>
    %c3_34 = arith.constant 3 : index
    %c0_35 = arith.constant 0 : index
    %c0_36 = arith.constant 0 : index
    %82 = vector.load %arg2[%c3_34, %c0_35, %c0_36] : memref<6x8x128xf32, #tpu.memory_space<vmem>>, vector<1x8x128xf32>
    %83 = vector.shape_cast %82 : vector<1x8x128xf32> to vector<8x128xf32>
    %84 = vector.shape_cast %81 : vector<8x128xf32> to vector<1x8x128xf32>
    tpu.vector_store %arg2[%c3_34, %c0_35, %c0_36], %84 {strides = array<i32>} : memref<6x8x128xf32, #tpu.memory_space<vmem>>, vector<1x8x128xf32>,
    %cst_37 = arith.constant 0.000000e+00 : f32
    %85 = vector.broadcast %cst_37 : f32 to vector<8x128xf32>
    %86 = arith.subf %85, %65 : vector<8x128xf32>
    %c4_38 = arith.constant 4 : index
    %c0_39 = arith.constant 0 : index
    %c0_40 = arith.constant 0 : index
    %87 = vector.load %arg2[%c4_38, %c0_39, %c0_40] : memref<6x8x128xf32, #tpu.memory_space<vmem>>, vector<1x8x128xf32>
    %88 = vector.shape_cast %87 : vector<1x8x128xf32> to vector<8x128xf32>
    %89 = vector.shape_cast %86 : vector<8x128xf32> to vector<1x8x128xf32>
    tpu.vector_store %arg2[%c4_38, %c0_39, %c0_40], %89 {strides = array<i32>} : memref<6x8x128xf32, #tpu.memory_space<vmem>>, vector<1x8x128xf32>,
    %cst_41 = arith.constant 0.000000e+00 : f32
    %90 = vector.broadcast %cst_41 : f32 to vector<8x128xf32>
    %91 = arith.subf %90, %70 : vector<8x128xf32>
    %c5_42 = arith.constant 5 : index
    %c0_43 = arith.constant 0 : index
    %c0_44 = arith.constant 0 : index
    %92 = vector.load %arg2[%c5_42, %c0_43, %c0_44] : memref<6x8x128xf32, #tpu.memory_space<vmem>>, vector<1x8x128xf32>
    %93 = vector.shape_cast %92 : vector<1x8x128xf32> to vector<8x128xf32>
    %94 = vector.shape_cast %91 : vector<8x128xf32> to vector<1x8x128xf32>
    tpu.vector_store %arg2[%c5_42, %c0_43, %c0_44], %94 {strides = array<i32>} : memref<6x8x128xf32, #tpu.memory_space<vmem>>, vector<1x8x128xf32>,
    return
  }
  func.func @transform_0(%arg0: i32) -> (i32, i32, i32) {
    %c0_i32 = arith.constant 0 : i32
    %c0_i32_0 = arith.constant 0 : i32
    %c0_i32_1 = arith.constant 0 : i32
    return %c0_i32, %arg0, %c0_i32_0 : i32, i32, i32
  }
  func.func @transform_1(%arg0: i32) -> (i32, i32, i32) {
    %c0_i32 = arith.constant 0 : i32
    %c0_i32_0 = arith.constant 0 : i32
    %c0_i32_1 = arith.constant 0 : i32
    return %c0_i32, %arg0, %c0_i32_0 : i32, i32, i32
  }
}

</mosaic_0001>

<llo_original>
// kernel: tpu_custom_call.1
$region0: #{tpu_custom_call.1}
  #allocation0 [shape = 'u32[]', space=smem, size = 0x4, offset = 0x4, fixed_abs, tag = 'smem constant byte address 0x4 - core index']
  #allocation1 [shape = 'u32[144,128]{1,0:T(1,128)}', space=vmem, size = 0x12000, scoped, tag = 'internal scratch']
  %s0 = inlined_call_operand.hbm [shape: f32[6,32,128], index: 0, kind: input, shape index: {}]
  %s1 = inlined_call_operand.hbm [shape: f32[6,32,128], index: 1, kind: output, shape index: {}]
  %s2 = sld [smem:[#allocation0]]
  $region41: #{tpu_custom_call.1} parent=0
    _
  %s4 = ssub.s32 1, %s2
  %s5 = scalar_select 0, %s4, %s2
  $region1: #{tpu_custom_call.1} parent=0
    #allocation2 [shape = 'u8[49152]{0}', space=vmem, size = 0xc000, scoped, tag = 'input window, operand 0']
    #allocation3 [shape = 's32[2]{0}', space=sflag, size = 0x8, scoped, tag = 'scoped memory for tpu_custom_call.1']
    #allocation4 [shape = 's32[2]{0}', space=sflag, size = 0x8, scoped, tag = 'scoped memory for tpu_custom_call.1']
    #allocation5 [shape = 'u8[49152]{0}', space=vmem, size = 0xc000, scoped, tag = 'output window, operand 0']
    %6 = vsyncpa [#allocation3], 0
    %s7 = scalar_lea.sflag [#allocation3], 1
    %8 = vsyncpa %s7, 0
    %9 = vsyncpa [#allocation4], 0
    %s10 = scalar_lea.sflag [#allocation4], 1
    %11 = vsyncpa %s10, 0
    loop: start=0, step=1, limit=6
    $region2: #{tpu_custom_call.1} parent=1 // loop_pre_header
      _
    $region3: #{tpu_custom_call.1} parent=1 // loop_header
      %s13 = sphi 0, %s17
      %p14 = scmp.ge.s32.totalorder %s13, 6
      %s23 = sphi 0, %s25
      %s26 = sphi 0, %s23
      %s27 = sphi 0, %s26
      %s43 = sphi 0, %s27
      %s49 = sphi 0, %s51
      %s52 = sphi 0, %s49
      %s53 = sphi 0, %s52
      %s69 = sphi 0, %s53
    $region4: #{tpu_custom_call.1} parent=1 // loop_header_branch
      %16 = sbr.rel (%p14) target = $region8
    $region5: #{tpu_custom_call.1} parent=1 // loop_body
      %s18 = ssub.s32 %s13, 1
      %s19 = ssub.s32 %s13, 2
      %s20 = sadd.s32 %s13, 1
      %s21 = ssub.s32 %s13, %s20
      %p22 = scmp.eq.s32.totalorder %s21, 0
      %s24 = sadd.s32 %s23, 1
      %s25 = scalar_select %p22, %s23, %s24
      %p28 = pneg %p22
      %p29 = scmp.eq.s32.totalorder %s13, 3
      %p30 = por %p28, %p29
      %p31 = scmp.ne.s32.totalorder %s23, %s26
      %p32 = scmp.eq.s32.totalorder %s13, 0
      %p33 = por %p31, %p32
      %p34 = scmp.ne.s32.totalorder %s23, %s26
      %p35 = scmp.eq.s32.totalorder %s18, 3
      %p36 = por %p34, %p35
      %p37 = scmp.ne.s32.totalorder %s26, %s27
      %p38 = scmp.eq.s32.totalorder %s18, 0
      %p39 = por %p37, %p38
      %p40 = scmp.ne.s32.totalorder %s26, %s27
      %p41 = scmp.eq.s32.totalorder %s19, 3
      %p42 = por %p40, %p41
      %p44 = scmp.ne.s32.totalorder %s27, %s43
      %p45 = scmp.eq.s32.totalorder %s19, 0
      %p46 = por %p44, %p45
      %s47 = ssub.s32 %s13, %s20
      %p48 = scmp.eq.s32.totalorder %s47, 0
      %s50 = sadd.s32 %s49, 1
      %s51 = scalar_select %p48, %s49, %s50
      %p54 = pneg %p48
      %p55 = scmp.eq.s32.totalorder %s13, 3
      %p56 = por %p54, %p55
      %p57 = scmp.ne.s32.totalorder %s49, %s52
      %p58 = scmp.eq.s32.totalorder %s13, 0
      %p59 = por %p57, %p58
      %p60 = scmp.ne.s32.totalorder %s49, %s52
      %p61 = scmp.eq.s32.totalorder %s18, 3
      %p62 = por %p60, %p61
      %p63 = scmp.ne.s32.totalorder %s52, %s53
      %p64 = scmp.eq.s32.totalorder %s18, 0
      %p65 = por %p63, %p64
      %p66 = scmp.ne.s32.totalorder %s52, %s53
      %p67 = scmp.eq.s32.totalorder %s19, 3
      %p68 = por %p66, %p67
      %p70 = scmp.ne.s32.totalorder %s53, %s69
      %p71 = scmp.eq.s32.totalorder %s19, 0
      %p72 = por %p70, %p71
      %p73 = scmp.le.s32.totalorder 1, %s13
      %p74 = scmp.lt.s32.totalorder %s13, 5
      %p75 = pnand %p73, %p74
      %p76 = pneg %p75
      // Predicated region
      $region9: #{tpu_custom_call.1} parent=5 // pred_check
        _
      $region10: #{tpu_custom_call.1} parent=5 // pred_check_branch
        %78 = sbr.rel (%p75) target = $region12
      $region11: #{tpu_custom_call.1} parent=5 // pred_region
        %s79 = ssub.s32 %s13, 1
      $region12: #{tpu_custom_call.1} parent=5 // pred_fallthru
        _
      %p80 = scmp.lt.s32.totalorder %s13, 4
      // Predicated region
      $region13: #{tpu_custom_call.1} parent=5 // pred_check
        %p81 = pneg %p80
      $region14: #{tpu_custom_call.1} parent=5 // pred_check_branch
        %83 = sbr.rel (%p81) target = $region16
      $region15: #{tpu_custom_call.1} parent=5 // pred_region
        // Predicated region
        $region17: #{tpu_custom_call.1} parent=15 // pred_check
          %p84 = pneg %p33
        $region18: #{tpu_custom_call.1} parent=15 // pred_check_branch
          %86 = sbr.rel (%p84) target = $region20
        $region19: #{tpu_custom_call.1} parent=15 // pred_region
          %s87 = sand.u32 %s23, 1
          %s88 = scalar_lea.sflag [#allocation3], %s87
          %s89 = sand.u32 %s23, 1
          %s90 = smul.addr %s89, 48
          %s91 = scalar_lea.vmem [#allocation2], %s90
          %s93 = ssub.s32 768, 768
          %94 = vsyncadd %s88, %s93
          %s95 = smul.addr %s13, 128
          %s96 = scalar_lea.hbm %s0, %s95
          %s97 = sshll.u32 %s91, 4
          %s98 = int_to_ptr.vmem [resolvable:$true] %s97
          %103 = dma.hbm_to_vmem [thread:$0]  %s96, 768, %s98, %s88, 512, 128, 8
        $region20: #{tpu_custom_call.1} parent=15 // pred_fallthru
          _
      $region16: #{tpu_custom_call.1} parent=5 // pred_fallthru
        _
      %p104 = scmp.le.s32.totalorder 1, %s13
      %p105 = scmp.lt.s32.totalorder %s13, 5
      %p106 = pnand %p104, %p105
      %p107 = pneg %p106
      // Predicated region
      $region21: #{tpu_custom_call.1} parent=5 // pred_check
        _
      $region22: #{tpu_custom_call.1} parent=5 // pred_check_branch
        %109 = sbr.rel (%p106) target = $region24
      $region23: #{tpu_custom_call.1} parent=5 // pred_region
        %s110 = ssub.s32 %s13, 1
        %s111 = sand.u32 %s26, 1
        %s112 = scalar_lea.sflag [#allocation3], %s111
        %s113 = sand.u32 %s26, 1
        %s114 = smul.addr %s113, 48
        %s115 = scalar_lea.vmem [#allocation2], %s114
        // Predicated region
        $region25: #{tpu_custom_call.1} parent=23 // pred_check
          %p116 = pneg %p39
        $region26: #{tpu_custom_call.1} parent=23 // pred_check_branch
          %118 = sbr.rel (%p116) target = $region28
        $region27: #{tpu_custom_call.1} parent=23 // pred_region
          %119 = dma.done %s112, 768
        $region28: #{tpu_custom_call.1} parent=23 // pred_fallthru
          _
        %s120 = sand.u32 %s26, 1
        %s121 = scalar_lea.sflag [#allocation3], %s120
        %s122 = sand.u32 %s26, 1
        %s123 = smul.addr %s122, 48
        %s124 = scalar_lea.vmem [#allocation2], %s123
        %p125 = pneg %p39
        %p126 = pneg %p36
        %p127 = pneg %p65
        %p128 = pneg %p62
        %s129 = sand.u32 %s52, 1
        %s130 = scalar_lea.sflag [#allocation4], %s129
        %s131 = sand.u32 %s52, 1
        %s132 = smul.addr %s131, 48
        %s133 = scalar_lea.vmem [#allocation5], %s132
        %v134 = vld [vmem:[%s115] sm:$0xff]
        %s135 = scalar_lea.vmem %s115, 8 [#allocation2]
        %v136 = vld [vmem:[%s135] sm:$0xff]
        %s137 = scalar_lea.vmem %s115, 16 [#allocation2]
        %v138 = vld [vmem:[%s137] sm:$0xff]
        %s139 = scalar_lea.vmem %s115, 24 [#allocation2]
        %v140 = vld [vmem:[%s139] sm:$0xff]
        %s141 = scalar_lea.vmem %s115, 32 [#allocation2]
        %v142 = vld [vmem:[%s141] sm:$0xff]
        %s143 = scalar_lea.vmem %s115, 40 [#allocation2]
        %v144 = vld [vmem:[%s143] sm:$0xff]
        %v145 = vadd.f32 %v134, %v140
        %v146 = vadd.f32 %v136, %v142
        %v147 = vadd.f32 %v138, %v144
        %v148 = vsub.f32 %v146, %v145
        %v149 = vmul.f32 %v148, 10.0
        %v150 = vmul.f32 %v145, 28.0
        %v151 = vsub.f32 %v150, %v146
        %v152 = vmul.f32 %v145, %v147
        %v153 = vsub.f32 %v151, %v152
        %v154 = vmul.f32 %v145, %v146
        %v155 = vmul.f32 %v147, 2.6666667
        %v156 = vsub.f32 %v154, %v155
        %v157 = vmul.f32 %v145, %v145
        %v158 = vmul.f32 %v146, %v146
        %v159 = vadd.f32 %v157, %v158
        %v160 = vmul.f32 %v147, %v147
        %v161 = vadd.f32 %v159, %v160
        %v162 = vmul.f32 %v145, %v149
        %v163 = vmul.f32 %v146, %v153
        %v164 = vadd.f32 %v162, %v163
        %v165 = vmul.f32 %v147, %v156
        %v166 = vadd.f32 %v164, %v165
        %v167 = vsub.f32 0.0, %v166
        %v168 = vsub.f32 %v167, %v161
        %v169 = vmul.f32 %v161, 0.5
        %v170 = vadd.f32 %v169, 0.025
        %vm171 = vcmp.lt.f32.partialorder %v168, 0.0
        %v172 = vrcp.pop %v170
        %v173 = vmul.f32 %v168, %v172
        %v174 = vsel %vm171, %v173, 0.0
        %v175 = vmul.f32 %v174, 0.5
        %v176 = vmul.f32 %v175, %v145
        %v177 = vmul.f32 %v175, %v146
        %v178 = vmul.f32 %v175, %v147
        %v179 = vsub.f32 %v136, %v134
        %v180 = vmul.f32 %v179, 10.0
        %v181 = vadd.f32 %v180, %v176
        %v182 = vmul.f32 %v134, 28.0
        %v183 = vsub.f32 %v182, %v136
        %v184 = vmul.f32 %v134, %v138
        %v185 = vsub.f32 %v183, %v184
        %v186 = vadd.f32 %v185, %v177
        %v187 = vmul.f32 %v134, %v136
        %v188 = vmul.f32 %v138, 2.6666667
        %v189 = vsub.f32 %v187, %v188
        %v190 = vadd.f32 %v189, %v178
        %191 = vst [vmem:[%s133] sm:$0xff] %v181
        %s192 = scalar_lea.vmem %s133, 8 [#allocation5]
        %193 = vst [vmem:[%s192] sm:$0xff] %v186
        %s194 = scalar_lea.vmem %s133, 16 [#allocation5]
        %195 = vst [vmem:[%s194] sm:$0xff] %v190
        %v196 = vsub.f32 0.0, %v181
        %s197 = scalar_lea.vmem %s133, 24 [#allocation5]
        %198 = vst [vmem:[%s197] sm:$0xff] %v196
        %v199 = vsub.f32 0.0, %v186
        %s200 = scalar_lea.vmem %s133, 32 [#allocation5]
        %201 = vst [vmem:[%s200] sm:$0xff] %v199
        %v202 = vsub.f32 0.0, %v190
        %s203 = scalar_lea.vmem %s133, 40 [#allocation5]
        %204 = vst [vmem:[%s203] sm:$0xff] %v202
        %s205 = sand.u32 %s52, 1
        %s206 = scalar_lea.sflag [#allocation4], %s205
        %s207 = sand.u32 %s52, 1
        %s208 = smul.addr %s207, 48
        %s209 = scalar_lea.vmem [#allocation5], %s208
        // Predicated region
        $region29: #{tpu_custom_call.1} parent=23 // pred_check
          %p210 = pneg %p62
        $region30: #{tpu_custom_call.1} parent=23 // pred_check_branch
          %212 = sbr.rel (%p210) target = $region32
        $region31: #{tpu_custom_call.1} parent=23 // pred_region
          %s214 = ssub.s32 768, 768
          %215 = vsyncadd %s206, %s214
          %s216 = smul.addr %s18, 128
          %s217 = scalar_lea.hbm %s1, %s216
          %s218 = sshll.u32 %s209, 4
          %s219 = int_to_ptr.vmem [resolvable:$true] %s218
          %224 = dma.vmem_to_hbm [thread:$0]  %s219, 768, %s217, %s206, 128, 512, 8
        $region32: #{tpu_custom_call.1} parent=23 // pred_fallthru
          _
      $region24: #{tpu_custom_call.1} parent=5 // pred_fallthru
        _
      %p225 = scmp.le.s32.totalorder 2, %s13
      // Predicated region
      $region33: #{tpu_custom_call.1} parent=5 // pred_check
        %p226 = pneg %p225
      $region34: #{tpu_custom_call.1} parent=5 // pred_check_branch
        %228 = sbr.rel (%p226) target = $region36
      $region35: #{tpu_custom_call.1} parent=5 // pred_region
        %s229 = ssub.s32 %s13, 2
        // Predicated region
        $region37: #{tpu_custom_call.1} parent=35 // pred_check
          %p230 = pneg %p68
        $region38: #{tpu_custom_call.1} parent=35 // pred_check_branch
          %232 = sbr.rel (%p230) target = $region40
        $region39: #{tpu_custom_call.1} parent=35 // pred_region
          %s233 = sand.u32 %s53, 1
          %s234 = scalar_lea.sflag [#allocation4], %s233
          %s235 = sand.u32 %s53, 1
          %s236 = smul.addr %s235, 48
          %s237 = scalar_lea.vmem [#allocation5], %s236
          %238 = dma.done %s234, 768
        $region40: #{tpu_custom_call.1} parent=35 // pred_fallthru
          _
      $region36: #{tpu_custom_call.1} parent=5 // pred_fallthru
        _
    $region6: #{tpu_custom_call.1} parent=1 // loop_footer
      %s17 = sadd.s32 1, %s13
    $region7: #{tpu_custom_call.1} parent=1 // loop_footer_branch
      %12 = sbr.rel target = $region3
    $region8: #{tpu_custom_call.1} parent=1 // loop_exit
      _
    %239 = vsyncpa [#allocation3], 1
    %s240 = scalar_lea.sflag [#allocation3], 1
    %241 = vsyncpa %s240, 1
    %242 = vsyncpa [#allocation4], 1
    %s243 = scalar_lea.sflag [#allocation4], 1
    %244 = vsyncpa %s243, 1

</llo_original>
